<compile_context>
chip_gen: v6e
topology: v6e:2x2x1
jax: 0.10.0
libtpu: 0.0.40
codegen_flags: <defaults>
</compile_context>

<pallas_src>
import math

import jax
import jax.numpy as jnp
from jax.experimental import pallas as pl
from jax.experimental.pallas import tpu as pltpu

_SQRT_2_OVER_PI = math.sqrt(2.0 / math.pi)
_GELU_K = 0.044715
_LANE_CANDIDATES = (4096, 2048, 1024, 512, 256, 128)


def _gelu_kernel(x_ref, o_ref):
    x = x_ref[...]
    # PyTorch uses fp32 opmath for half dtypes; upcast sub-32-bit inputs.
    compute_dtype = jnp.float32 if jnp.dtype(x.dtype).itemsize < 4 else x.dtype
    xf = x.astype(compute_dtype)

    c = jnp.asarray(_SQRT_2_OVER_PI, compute_dtype)
    ck = jnp.asarray(_SQRT_2_OVER_PI * _GELU_K, compute_dtype)

    # c*(x + k*x^3) == x*(c + c*k*x^2): 4 VALU ops for the argument.
    inner = xf * (c + ck * (xf * xf))
    t = jnp.tanh(inner)                 # exactly one EUP transcendental
    half_x = 0.5 * xf
    # 0.5*x*(1 + tanh(z)) == 0.5*x + 0.5*x*tanh(z)
    o_ref[...] = (half_x + half_x * t).astype(o_ref.dtype)


def _gelu_jnp(x):
    # Plain-JAX tanh-form GELU: tiny-input fast path and ragged tails.
    compute_dtype = jnp.float32 if jnp.dtype(x.dtype).itemsize < 4 else x.dtype
    xf = x.astype(compute_dtype)
    c = jnp.asarray(_SQRT_2_OVER_PI, compute_dtype)
    out = 0.5 * xf * (1.0 + jnp.tanh(c * (xf + _GELU_K * xf * xf * xf)))
    return out.astype(x.dtype)


def _pick_lane(n: int):
    """Widest lane-dense slab width (multiple of 128) dividing n exactly."""
    for w in _LANE_CANDIDATES:
        if n % w == 0:
            return w
    return None


def _round_up(a: int, m: int) -> int:
    return ((a + m - 1) // m) * m


def _default_target_tile_bytes() -> int:
    # ~4 MiB tiles on v7x (3.2 TB/s HBM), ~2 MiB elsewhere.  Both keep the
    # 4x double-buffered footprint within every default scoped-VMEM budget.
    try:
        kind = jax.devices()[0].device_kind.lower()
    except Exception:
        kind = ""
    if "v7" in kind:
        return 4 * 1024 * 1024
    return 2 * 1024 * 1024


def gelu(x: jax.Array, *, target_tile_bytes: int | None = None,
         small_fast_path_bytes: int = 512 * 1024, donate: bool = False) -> jax.Array:
    """Tanh-approx GELU, elementwise, any input shape."""
    orig_shape = x.shape
    n = x.size
    if n == 0:
        return x
    itemsize = jnp.dtype(x.dtype).itemsize

    # Tiny inputs: fused XLA elementwise beats kernel-launch + 1-step overhead.
    if n * itemsize <= small_fast_path_bytes:
        return _gelu_jnp(x)

    if target_tile_bytes is None:
        target_tile_bytes = _default_target_tile_bytes()

    x_flat = jnp.ravel(x)
    lane = _pick_lane(n)

    if lane is None:
        # Ragged case (n not a multiple of 128): kernel on the 128-aligned
        # bulk, plain jnp on the (<128-element) tail.
        # TODO(synk): the concatenate below costs one extra full HBM
        # read+write of the output for ragged inputs; a masked partial final
        # block would avoid it, but ragged large activations are rare.
        bulk = (n // 128) * 128
        if bulk == 0:
            return _gelu_jnp(x)
        head = gelu(x_flat[:bulk], target_tile_bytes=target_tile_bytes,
                    small_fast_path_bytes=small_fast_path_bytes, donate=False)
        tail = _gelu_jnp(x_flat[bulk:])
        return jnp.concatenate([head, tail]).reshape(orig_shape)

    rows = n // lane
    x2d = x_flat.reshape(rows, lane)

    # Dtype-aware packed-sublane multiple: 8 (f32), 16 (bf16/f16), 32 (8-bit).
    mult = max(8, 32 // itemsize)
    bytes_per_row = lane * itemsize

    # Target block ~target_tile_bytes; allow growing to 1.5x when chasing an
    # even grid (4 blocks of 1.5x target still fit v5e's 16 MiB scoped VMEM
    # at the 2 MiB default, and v6e/v7x's 32 MiB at the 4 MiB v7x default).
    tgt_rows = max(mult, (target_tile_bytes // bytes_per_row) // mult * mult)
    max_rows = max(mult, ((target_tile_bytes * 3 // 2) // bytes_per_row) // mult * mult)
    tgt_rows = min(tgt_rows, max_rows)

    if rows <= tgt_rows:
        if rows >= 2 * mult:
            # Two steps: keeps pipelining alive and lets v7x use both TCs.
            block_rows = _round_up(pl.cdiv(rows, 2), mult)
        else:
            block_rows = rows            # single full-extent block
    else:
        block_rows = tgt_rows
        # Prefer an even number of grid steps (v7x megacore balance); bump the
        # block a little (bounded by max_rows) until the realized grid is even.
        while (pl.cdiv(rows, block_rows) % 2 == 1
               and block_rows + mult <= max_rows):
            block_rows += mult
    block_rows = min(block_rows, rows)

    grid = (pl.cdiv(rows, block_rows),)

    out2d = pl.pallas_call(
        _gelu_kernel,
        out_shape=jax.ShapeDtypeStruct((rows, lane), x.dtype),
        grid=grid,
        in_specs=[pl.BlockSpec((block_rows, lane), lambda i: (i, 0))],
        out_specs=pl.BlockSpec((block_rows, lane), lambda i: (i, 0)),
        compiler_params=pltpu.CompilerParams(
            dimension_semantics=("parallel",)),
        input_output_aliases=({0: 0} if donate else {}),
    )(x2d)

    return out2d.reshape(orig_shape)


def gelu_ref(x):
    c = math.sqrt(2.0 / math.pi)
    return 0.5 * x * (1.0 + jnp.tanh(c * (x + 0.044715 * jnp.power(x, 3))))


if __name__ == "__main__":
    key = jax.random.PRNGKey(0)
    # Small NCHW-style input, matching typical PyTorch activations.
    x = jax.random.normal(key, (2, 4, 16, 16), dtype=jnp.float32)

    # Default path: tiny input takes the fused-XLA fast path.
    out_fast = jax.block_until_ready(gelu(x))
    # Force the Pallas kernel path on the same input.
    out_pallas = jax.block_until_ready(gelu(x, small_fast_path_bytes=0))

    ref = gelu_ref(x)
    assert out_pallas.shape == x.shape and out_pallas.dtype == x.dtype
    assert jnp.allclose(out_fast, ref, atol=1e-5, rtol=1e-5), "fast path mismatch"
    assert jnp.allclose(out_pallas, ref, atol=1e-5, rtol=1e-5), "pallas mismatch"

    # bf16 input exercises the f32-opmath path inside the kernel.
    xb = jax.random.normal(jax.random.PRNGKey(0), (4, 8, 128), dtype=jnp.bfloat16)
    outb = jax.block_until_ready(gelu(xb, small_fast_path_bytes=0))
    refb = gelu_ref(xb.astype(jnp.float32))
    assert outb.dtype == jnp.bfloat16
    assert jnp.allclose(outb.astype(jnp.float32), refb, atol=2e-2, rtol=2e-2), \
        "bf16 pallas mismatch"

    print("KERNEL_OK")
</pallas_src>

<mosaic_0001>
module attributes {stable_mosaic.version = 11 : i64} {
  func.func @_gelu_kernel(%arg0: i32, %arg1: memref<1x2048xf32, #tpu.memory_space<vmem>>, %arg2: memref<1x2048xf32, #tpu.memory_space<vmem>>) attributes {dimension_semantics = [#tpu.dimension_semantics<parallel>], iteration_bounds = array<i64: 1>, scalar_prefetch = 0 : i64, scratch_operands = 0 : i64, tpu.core_type = #tpu.core_type<tc>, window_params = [{transform_indices = @transform_0, window_bounds = array<i64: 1, 2048>}, {transform_indices = @transform_1, window_bounds = array<i64: 1, 2048>}]} {
    %c0 = arith.constant 0 : index
    %c0_0 = arith.constant 0 : index
    %0 = vector.load %arg1[%c0, %c0_0] : memref<1x2048xf32, #tpu.memory_space<vmem>>, vector<1x2048xf32>
    %1 = arith.mulf %0, %0 : vector<1x2048xf32>
    %cst = arith.constant 0.0356774069 : f32
    %2 = vector.broadcast %cst : f32 to vector<1x2048xf32>
    %3 = arith.mulf %2, %1 : vector<1x2048xf32>
    %cst_1 = arith.constant 0.797884583 : f32
    %4 = vector.broadcast %cst_1 : f32 to vector<1x2048xf32>
    %5 = arith.addf %4, %3 : vector<1x2048xf32>
    %6 = arith.mulf %0, %5 : vector<1x2048xf32>
    %7 = math.tanh %6 : vector<1x2048xf32>
    %cst_2 = arith.constant 5.000000e-01 : f32
    %8 = vector.broadcast %cst_2 : f32 to vector<1x2048xf32>
    %9 = arith.mulf %8, %0 : vector<1x2048xf32>
    %10 = arith.mulf %9, %7 : vector<1x2048xf32>
    %11 = arith.addf %9, %10 : vector<1x2048xf32>
    %c0_3 = arith.constant 0 : index
    %c0_4 = arith.constant 0 : index
    %12 = vector.load %arg2[%c0_3, %c0_4] : memref<1x2048xf32, #tpu.memory_space<vmem>>, vector<1x2048xf32>
    tpu.vector_store %arg2[%c0_3, %c0_4], %11 {strides = array<i32>} : memref<1x2048xf32, #tpu.memory_space<vmem>>, vector<1x2048xf32>,
    return
  }
  func.func @transform_0(%arg0: i32) -> (i32, i32) {
    %c0_i32 = arith.constant 0 : i32
    %c0_i32_0 = arith.constant 0 : i32
    return %arg0, %c0_i32 : i32, i32
  }
  func.func @transform_1(%arg0: i32) -> (i32, i32) {
    %c0_i32 = arith.constant 0 : i32
    %c0_i32_0 = arith.constant 0 : i32
    return %arg0, %c0_i32 : i32, i32
  }
}

</mosaic_0001>

<llo_original>
// kernel: tpu_custom_call.1
$region0: #{tpu_custom_call.1}
  #allocation0 [shape = 'u32[]', space=smem, size = 0x4, offset = 0x4, fixed_abs, tag = 'smem constant byte address 0x4 - core index']
  #allocation1 [shape = 'u32[144,128]{1,0:T(1,128)}', space=vmem, size = 0x12000, scoped, tag = 'internal scratch']
  %s0 = inlined_call_operand.hbm [shape: f32[1,2048], index: 0, kind: input, shape index: {}]
  %s1 = inlined_call_operand.hbm [shape: f32[1,2048], index: 1, kind: output, shape index: {}]
  %s2 = sld [smem:[#allocation0]]
  $region18: #{tpu_custom_call.1} parent=0
    _
  %s4 = ssub.s32 1, %s2
  %s5 = scalar_select 0, %s4, %s2
  $region1: #{tpu_custom_call.1} parent=0
    #allocation2 [shape = 'u8[8192]{0}', space=vmem, size = 0x2000, scoped, tag = 'input window, operand 0, single buffered']
    #allocation3 [shape = 's32[1]{0}', space=sflag, size = 0x4, scoped, tag = 'scoped memory for tpu_custom_call.1']
    #allocation4 [shape = 's32[1]{0}', space=sflag, size = 0x4, scoped, tag = 'scoped memory for tpu_custom_call.1']
    #allocation5 [shape = 'u8[8192]{0}', space=vmem, size = 0x2000, scoped, tag = 'output window, operand 0, single buffered']
    %6 = vsyncpa [#allocation3], 0
    %7 = vsyncpa [#allocation4], 0
    // Predicated region
    $region2: #{tpu_custom_call.1} parent=1 // pred_check
      _
    $region3: #{tpu_custom_call.1} parent=1 // pred_check_branch
      %9 = sbr.rel (0) target = $region5
    $region4: #{tpu_custom_call.1} parent=1 // pred_region
      %s11 = ssub.s32 256, 256
      %12 = vsyncadd [#allocation3], %s11
      %s14 = sshll.u32 [#allocation2], 4
      %s15 = int_to_ptr.vmem [resolvable:$true] %s14
      %17 = dma.hbm_to_vmem [thread:$0]  %s0, 256, %s15, [#allocation3]
    $region5: #{tpu_custom_call.1} parent=1 // pred_fallthru
      _
    // Predicated region
    $region6: #{tpu_custom_call.1} parent=1 // pred_check
      _
    $region7: #{tpu_custom_call.1} parent=1 // pred_check_branch
      %19 = sbr.rel (0) target = $region9
    $region8: #{tpu_custom_call.1} parent=1 // pred_region
      %20 = dma.done [#allocation3], 256
    $region9: #{tpu_custom_call.1} parent=1 // pred_fallthru
      _
    %v21 = vld [vmem:[#allocation2] sm:$0xff]
    %v22 = vld [vmem:[#allocation2 + $0x8] sm:$0xff]
    %v23 = vmul.f32 %v21, %v21
    %v24 = vmul.f32 %v22, %v22
    %v25 = vmul.f32 %v23, 0.035677407
    %v26 = vmul.f32 %v24, 0.035677407
    %v27 = vadd.f32 %v25, 0.7978846
    %v28 = vadd.f32 %v26, 0.7978846
    %v29 = vmul.f32 %v21, %v27
    %v30 = vmul.f32 %v22, %v28
    %v31 = vtanh.pop %v29
    %v32 = vtanh.pop %v30
    %v33 = vmul.f32 %v21, 0.5
    %v34 = vmul.f32 %v22, 0.5
    %v35 = vmul.f32 %v33, %v31
    %v36 = vmul.f32 %v34, %v32
    %v37 = vadd.f32 %v33, %v35
    %v38 = vadd.f32 %v34, %v36
    %39 = vst [vmem:[#allocation5] sm:$0xff] %v37
    %40 = vst [vmem:[#allocation5 + $0x8] sm:$0xff] %v38
    // Predicated region
    $region10: #{tpu_custom_call.1} parent=1 // pred_check
      _
    $region11: #{tpu_custom_call.1} parent=1 // pred_check_branch
      %42 = sbr.rel (0) target = $region13
    $region12: #{tpu_custom_call.1} parent=1 // pred_region
      %s44 = ssub.s32 256, 256
      %45 = vsyncadd [#allocation4], %s44
      %s47 = sshll.u32 [#allocation5], 4
      %s48 = int_to_ptr.vmem [resolvable:$true] %s47
      %50 = dma.vmem_to_hbm [thread:$0]  %s48, 256, %s1, [#allocation4]
    $region13: #{tpu_custom_call.1} parent=1 // pred_fallthru
      _
    // Predicated region
    $region14: #{tpu_custom_call.1} parent=1 // pred_check
      _
    $region15: #{tpu_custom_call.1} parent=1 // pred_check_branch
      %52 = sbr.rel (0) target = $region17
    $region16: #{tpu_custom_call.1} parent=1 // pred_region
      %53 = dma.done [#allocation4], 256
    $region17: #{tpu_custom_call.1} parent=1 // pred_fallthru
      _
    %54 = vsyncpa [#allocation3], 1
    %55 = vsyncpa [#allocation4], 1

</llo_original>
